<compile_context>
chip_gen: v7x
topology: tpu7x:2x2x1
jax: 0.10.0
libtpu: 0.0.40
codegen_flags: <defaults>
</compile_context>

<pallas_src>
import functools

import jax
import jax.numpy as jnp
from jax.experimental import pallas as pl
from jax.experimental.pallas import tpu as pltpu


def gcn_kernel(edges_ref, x_ref, wt_ref, gb_ref, o_ref, *, bb, n, d, use_vpu_agg):
    # edges_ref: (BB, N, N), x_ref: (BB*N, D), wt_ref: (D_in, D_out),
    # gb_ref: (2, D) [gamma; beta], o_ref: (BB*N, D)
    x_in = x_ref[...]                                     # (BB*N, D)
    mm_dtype = wt_ref.dtype

    # Dense Linear first (A @ (X W^T) == (A X) W^T): the one big MXU matmul
    # consumes the 2-D ref directly, filling BB*N rows per step.
    xw = jnp.dot(x_in.astype(mm_dtype), wt_ref[...],
                 preferred_element_type=jnp.float32)      # (BB*N, D) f32
    xw3 = xw.reshape(bb, n, d)                            # 3-D view for aggregation

    if use_vpu_agg:
        # Small N: per-graph aggregation as unrolled VPU broadcast-MACs (the
        # batched (N,N)@(N,D) matmuls would underfill the MXU and pay per-batch
        # MRF-pop latency on v5e/v6e).
        edges = edges_ref[...].astype(jnp.float32)        # (BB, N, N)
        ctx3 = edges[:, :, 0:1] * xw3[:, 0:1, :]
        for j in range(1, n):                             # static unroll, N <= 32
            ctx3 = ctx3 + edges[:, :, j:j + 1] * xw3[:, j:j + 1, :]
    else:
        # Larger N: batched MXU matmul with f32 accumulation.
        ctx3 = jnp.einsum('bij,bjd->bid',
                          edges_ref[...].astype(mm_dtype),
                          xw3.astype(mm_dtype),
                          preferred_element_type=jnp.float32)
    ctx = ctx3.reshape(bb * n, d)                         # (BB*N, D) f32

    # Residual (dropout p=0.0 -> identity) + LayerNorm, all in f32.
    h = x_in.astype(jnp.float32) + ctx
    inv_d = jnp.float32(1.0 / d)
    mean = jnp.sum(h, axis=-1, keepdims=True) * inv_d
    centered = h - mean
    var = jnp.sum(centered * centered, axis=-1, keepdims=True) * inv_d
    normed = centered * jax.lax.rsqrt(var + jnp.float32(1e-5))
    gamma = gb_ref[0:1, :]                                # (1, D)
    beta = gb_ref[1:2, :]                                 # (1, D)
    o_ref[...] = (normed * gamma + beta).astype(o_ref.dtype)


def _tpu_vmem_capacity_bytes():
    """Physical VMEM capacity (chip-aware); conservative 64 MiB fallback (v7x)."""
    try:
        info = pltpu.get_tpu_info()
        cap = int(getattr(info, "vmem_capacity_bytes", 0))
        if cap > 0:
            return cap
    except Exception:
        pass
    return 64 << 20


def _pick_batch_block(B, N, D, x_itemsize, e_itemsize, out_itemsize, budget_bytes):
    """Pick the batch block BB. In order of priority:
       - legality: (BB*N, D) blocks need (BB*N) % 8 == 0 unless BB == B
         (a block equal to the full array is always legal);
       - double-buffered streaming tiles fit `budget_bytes`;
       - grid length B//BB >= 2 when B > 1 (both v7x TensorCores get work);
       - >= 256 matmul rows per step if achievable, else the largest fitting
         block (amortizes the ~0.35us per-step pipeline overhead)."""
    def tile_bytes(bb):
        # double-buffered streaming tiles: edges + node_fts + output
        return 2 * (bb * N * N * e_itemsize
                    + bb * N * D * x_itemsize
                    + bb * N * D * out_itemsize)

    legal = [b for b in range(1, B + 1)
             if B % b == 0 and ((b * N) % 8 == 0 or b == B)]
    fitting = [b for b in legal if tile_bytes(b) <= budget_bytes] or legal[:1]
    multi = [b for b in fitting if B // b >= 2]
    cands = multi if multi else fitting
    for b in cands:
        if b * N >= 256:
            return b
    return cands[-1]


def gcn_layer(node_fts, rel_edges, weight, gamma, beta, *, use_bf16_matmul=None):
    """node_fts: (B, N, D), rel_edges: (B, N, N), weight: (D_out, D_in)
    (PyTorch Linear layout), gamma/beta: (D,). Returns (B, N, D)."""
    B, N, D = node_fts.shape
    if use_bf16_matmul is None:
        # bf16 MXU inputs (with f32 accumulation) and bf16 edge streaming pay
        # off at realistic widths; tiny widths stay f32 for tight numerics.
        use_bf16_matmul = D >= 128
    mm_dtype = jnp.bfloat16 if use_bf16_matmul else jnp.float32

    # Layout plumbing done wrapper-side (free XLA reshape / fusible casts).
    x2d = node_fts.reshape(B * N, D)
    weight_t = weight.T.astype(mm_dtype)                    # (D_in, D_out)
    gb = jnp.stack([gamma, beta]).astype(jnp.float32)       # (2, D) resident
    edges = rel_edges.astype(mm_dtype) if use_bf16_matmul else rel_edges

    e_item = jnp.dtype(edges.dtype).itemsize
    x_item = jnp.dtype(node_fts.dtype).itemsize
    w_item = jnp.dtype(weight_t.dtype).itemsize

    cap = _tpu_vmem_capacity_bytes()
    BB = _pick_batch_block(B, N, D, x_item, e_item, x_item,
                           budget_bytes=max(int(cap * 0.35), 4 << 20))
    grid = (B // BB,)

    # VMEM budget: double-buffered streaming tiles + resident params (also
    # double-buffered by the pipeline) + headroom for f32 intermediates.
    stream = 2 * (BB * N * N * e_item + 2 * BB * N * D * x_item)
    resident = 2 * (D * D * w_item + 2 * D * 4)
    scratch = 8 * BB * N * D * 4
    vmem_limit = int(min(1.25 * (stream + resident + scratch), cap * 0.75))
    vmem_limit = max(vmem_limit, int(min(16 << 20, cap * 0.75)))

    cost = pl.CostEstimate(
        flops=B * (2 * N * N * D + 2 * N * D * D),
        transcendentals=B * N,                              # one rsqrt per row
        bytes_accessed=int(edges.size * e_item + 2 * node_fts.size * x_item
                           + weight_t.size * w_item + gb.size * 4),
    )

    kernel = functools.partial(gcn_kernel, bb=BB, n=N, d=D,
                               use_vpu_agg=(N <= 32))

    out2d = pl.pallas_call(
        kernel,
        out_shape=jax.ShapeDtypeStruct((B * N, D), node_fts.dtype),
        grid_spec=pltpu.PrefetchScalarGridSpec(
            num_scalar_prefetch=0,
            grid=grid,
            in_specs=[
                pl.BlockSpec((BB, N, N), lambda b: (b, 0, 0)),   # rel_edges
                pl.BlockSpec((BB * N, D), lambda b: (b, 0)),     # node_fts (2-D)
                pl.BlockSpec((D, D), lambda b: (0, 0)),          # W^T (resident)
                pl.BlockSpec((2, D), lambda b: (0, 0)),          # gamma/beta
            ],
            out_specs=pl.BlockSpec((BB * N, D), lambda b: (b, 0)),
        ),
        compiler_params=pltpu.CompilerParams(
            dimension_semantics=("parallel",),
            vmem_limit_bytes=vmem_limit,
        ),
        cost_estimate=cost,
    )(edges, x2d, weight_t, gb)

    return out2d.reshape(B, N, D)


if __name__ == "__main__":
    # Small shapes consistent with the module: batch=2, num_nodes=8, dim=32.
    B, N, D = 2, 8, 32
    key = jax.random.PRNGKey(0)
    k1, k2, k3 = jax.random.split(key, 3)

    node_fts = jax.random.normal(k1, (B, N, D), dtype=jnp.float32)
    rel_edges = jax.random.uniform(k2, (B, N, N), dtype=jnp.float32)

    # PyTorch Linear default init: U(-1/sqrt(fan_in), +1/sqrt(fan_in)).
    bound = 1.0 / (D ** 0.5)
    weight = jax.random.uniform(k3, (D, D), dtype=jnp.float32,
                                minval=-bound, maxval=bound)
    gamma = jnp.ones((D,), dtype=jnp.float32)    # LayerNorm weight
    beta = jnp.zeros((D,), dtype=jnp.float32)    # LayerNorm bias

    # Default path (f32 at this tiny D) -- tight reference check.
    out = gcn_layer(node_fts, rel_edges, weight, gamma, beta)
    jax.block_until_ready(out)

    ref_ctx = jnp.einsum('bij,bjd->bid', rel_edges, node_fts) @ weight.T
    ref_h = node_fts + ref_ctx
    mu = ref_h.mean(-1, keepdims=True)
    var = ((ref_h - mu) ** 2).mean(-1, keepdims=True)
    ref = (ref_h - mu) * jax.lax.rsqrt(var + 1e-5) * gamma + beta
    assert jnp.allclose(out, ref, atol=1e-4, rtol=1e-4), "mismatch vs reference (f32)"

    # Also exercise the bf16-streaming path (what D >= 128 uses by default);
    # f32 accumulation keeps it within a loose tolerance of the f32 reference.
    out_bf16 = gcn_layer(node_fts, rel_edges, weight, gamma, beta,
                         use_bf16_matmul=True)
    jax.block_until_ready(out_bf16)
    assert jnp.allclose(out_bf16, ref, atol=5e-2, rtol=5e-2), "mismatch vs reference (bf16)"

    print("KERNEL_OK")
</pallas_src>

<mosaic_0001>
module attributes {stable_mosaic.version = 11 : i64} {
  func.func @gcn_kernel(%arg0: i32, %arg1: memref<1x8x8xf32, #tpu.memory_space<vmem>>, %arg2: memref<8x32xf32, #tpu.memory_space<vmem>>, %arg3: memref<32x32xf32, #tpu.memory_space<vmem>>, %arg4: memref<2x32xf32, #tpu.memory_space<vmem>>, %arg5: memref<8x32xf32, #tpu.memory_space<vmem>>) attributes {dimension_semantics = [#tpu.dimension_semantics<parallel>], iteration_bounds = array<i64: 2>, scalar_prefetch = 0 : i64, scratch_operands = 0 : i64, tpu.core_type = #tpu.core_type<tc>, window_params = [{transform_indices = @transform_0, window_bounds = array<i64: 1, 8, 8>}, {transform_indices = @transform_1, window_bounds = array<i64: 8, 32>}, {pipeline_mode = #tpu.pipeline_mode<synchronous>, transform_indices = @transform_2, window_bounds = array<i64: 32, 32>}, {pipeline_mode = #tpu.pipeline_mode<synchronous>, transform_indices = @transform_3, window_bounds = array<i64: 2, 32>}, {transform_indices = @transform_4, window_bounds = array<i64: 8, 32>}]} {
    %c0 = arith.constant 0 : index
    %c0_0 = arith.constant 0 : index
    %0 = vector.load %arg2[%c0, %c0_0] : memref<8x32xf32, #tpu.memory_space<vmem>>, vector<8x32xf32>
    %c0_1 = arith.constant 0 : index
    %c0_2 = arith.constant 0 : index
    %1 = vector.load %arg3[%c0_1, %c0_2] : memref<32x32xf32, #tpu.memory_space<vmem>>, vector<32x32xf32>
    %cst = arith.constant dense<0.000000e+00> : vector<8x32xf32>
    %2 = tpu.matmul %0, %1, %cst {dimension_numbers = #tpu.dot_dimension_numbers<[1], [0], [0], [1], [0, 0, 1, 1], [], []>} : vector<8x32xf32>, vector<32x32xf32>, vector<8x32xf32> -> vector<8x32xf32>
    %3 = vector.shape_cast %2 : vector<8x32xf32> to vector<1x8x32xf32>
    %c0_3 = arith.constant 0 : index
    %c0_4 = arith.constant 0 : index
    %c0_5 = arith.constant 0 : index
    %4 = vector.load %arg1[%c0_3, %c0_4, %c0_5] : memref<1x8x8xf32, #tpu.memory_space<vmem>>, vector<1x8x8xf32>
    %5 = vector.extract_strided_slice %4 {offsets = [0, 0, 0], sizes = [1, 8, 1], strides = [1, 1, 1]} : vector<1x8x8xf32> to vector<1x8x1xf32>
    %6 = vector.extract_strided_slice %3 {offsets = [0, 0, 0], sizes = [1, 1, 32], strides = [1, 1, 1]} : vector<1x8x32xf32> to vector<1x1x32xf32>
    %7 = vector.broadcast %5 : vector<1x8x1xf32> to vector<1x8x32xf32>
    %8 = vector.broadcast %6 : vector<1x1x32xf32> to vector<1x8x32xf32>
    %9 = arith.mulf %7, %8 : vector<1x8x32xf32>
    %10 = vector.extract_strided_slice %4 {offsets = [0, 0, 1], sizes = [1, 8, 1], strides = [1, 1, 1]} : vector<1x8x8xf32> to vector<1x8x1xf32>
    %11 = vector.extract_strided_slice %3 {offsets = [0, 1, 0], sizes = [1, 1, 32], strides = [1, 1, 1]} : vector<1x8x32xf32> to vector<1x1x32xf32>
    %12 = vector.broadcast %10 : vector<1x8x1xf32> to vector<1x8x32xf32>
    %13 = vector.broadcast %11 : vector<1x1x32xf32> to vector<1x8x32xf32>
    %14 = arith.mulf %12, %13 : vector<1x8x32xf32>
    %15 = arith.addf %9, %14 : vector<1x8x32xf32>
    %16 = vector.extract_strided_slice %4 {offsets = [0, 0, 2], sizes = [1, 8, 1], strides = [1, 1, 1]} : vector<1x8x8xf32> to vector<1x8x1xf32>
    %17 = vector.extract_strided_slice %3 {offsets = [0, 2, 0], sizes = [1, 1, 32], strides = [1, 1, 1]} : vector<1x8x32xf32> to vector<1x1x32xf32>
    %18 = vector.broadcast %16 : vector<1x8x1xf32> to vector<1x8x32xf32>
    %19 = vector.broadcast %17 : vector<1x1x32xf32> to vector<1x8x32xf32>
    %20 = arith.mulf %18, %19 : vector<1x8x32xf32>
    %21 = arith.addf %15, %20 : vector<1x8x32xf32>
    %22 = vector.extract_strided_slice %4 {offsets = [0, 0, 3], sizes = [1, 8, 1], strides = [1, 1, 1]} : vector<1x8x8xf32> to vector<1x8x1xf32>
    %23 = vector.extract_strided_slice %3 {offsets = [0, 3, 0], sizes = [1, 1, 32], strides = [1, 1, 1]} : vector<1x8x32xf32> to vector<1x1x32xf32>
    %24 = vector.broadcast %22 : vector<1x8x1xf32> to vector<1x8x32xf32>
    %25 = vector.broadcast %23 : vector<1x1x32xf32> to vector<1x8x32xf32>
    %26 = arith.mulf %24, %25 : vector<1x8x32xf32>
    %27 = arith.addf %21, %26 : vector<1x8x32xf32>
    %28 = vector.extract_strided_slice %4 {offsets = [0, 0, 4], sizes = [1, 8, 1], strides = [1, 1, 1]} : vector<1x8x8xf32> to vector<1x8x1xf32>
    %29 = vector.extract_strided_slice %3 {offsets = [0, 4, 0], sizes = [1, 1, 32], strides = [1, 1, 1]} : vector<1x8x32xf32> to vector<1x1x32xf32>
    %30 = vector.broadcast %28 : vector<1x8x1xf32> to vector<1x8x32xf32>
    %31 = vector.broadcast %29 : vector<1x1x32xf32> to vector<1x8x32xf32>
    %32 = arith.mulf %30, %31 : vector<1x8x32xf32>
    %33 = arith.addf %27, %32 : vector<1x8x32xf32>
    %34 = vector.extract_strided_slice %4 {offsets = [0, 0, 5], sizes = [1, 8, 1], strides = [1, 1, 1]} : vector<1x8x8xf32> to vector<1x8x1xf32>
    %35 = vector.extract_strided_slice %3 {offsets = [0, 5, 0], sizes = [1, 1, 32], strides = [1, 1, 1]} : vector<1x8x32xf32> to vector<1x1x32xf32>
    %36 = vector.broadcast %34 : vector<1x8x1xf32> to vector<1x8x32xf32>
    %37 = vector.broadcast %35 : vector<1x1x32xf32> to vector<1x8x32xf32>
    %38 = arith.mulf %36, %37 : vector<1x8x32xf32>
    %39 = arith.addf %33, %38 : vector<1x8x32xf32>
    %40 = vector.extract_strided_slice %4 {offsets = [0, 0, 6], sizes = [1, 8, 1], strides = [1, 1, 1]} : vector<1x8x8xf32> to vector<1x8x1xf32>
    %41 = vector.extract_strided_slice %3 {offsets = [0, 6, 0], sizes = [1, 1, 32], strides = [1, 1, 1]} : vector<1x8x32xf32> to vector<1x1x32xf32>
    %42 = vector.broadcast %40 : vector<1x8x1xf32> to vector<1x8x32xf32>
    %43 = vector.broadcast %41 : vector<1x1x32xf32> to vector<1x8x32xf32>
    %44 = arith.mulf %42, %43 : vector<1x8x32xf32>
    %45 = arith.addf %39, %44 : vector<1x8x32xf32>
    %46 = vector.extract_strided_slice %4 {offsets = [0, 0, 7], sizes = [1, 8, 1], strides = [1, 1, 1]} : vector<1x8x8xf32> to vector<1x8x1xf32>
    %47 = vector.extract_strided_slice %3 {offsets = [0, 7, 0], sizes = [1, 1, 32], strides = [1, 1, 1]} : vector<1x8x32xf32> to vector<1x1x32xf32>
    %48 = vector.broadcast %46 : vector<1x8x1xf32> to vector<1x8x32xf32>
    %49 = vector.broadcast %47 : vector<1x1x32xf32> to vector<1x8x32xf32>
    %50 = arith.mulf %48, %49 : vector<1x8x32xf32>
    %51 = arith.addf %45, %50 : vector<1x8x32xf32>
    %52 = vector.shape_cast %51 : vector<1x8x32xf32> to vector<8x32xf32>
    %53 = arith.addf %0, %52 : vector<8x32xf32>
    %cst_6 = arith.constant dense<0.000000e+00> : vector<8xf32>
    %54 = vector.multi_reduction <add>, %53, %cst_6 [1] : vector<8x32xf32> to vector<8xf32>
    %55 = vector.shape_cast %54 : vector<8xf32> to vector<8x1xf32>
    %cst_7 = arith.constant 3.125000e-02 : f32
    %56 = vector.broadcast %cst_7 : f32 to vector<8x1xf32>
    %57 = arith.mulf %55, %56 : vector<8x1xf32>
    %58 = vector.broadcast %57 : vector<8x1xf32> to vector<8x32xf32>
    %59 = arith.subf %53, %58 : vector<8x32xf32>
    %60 = arith.mulf %59, %59 : vector<8x32xf32>
    %cst_8 = arith.constant dense<0.000000e+00> : vector<8xf32>
    %61 = vector.multi_reduction <add>, %60, %cst_8 [1] : vector<8x32xf32> to vector<8xf32>
    %62 = vector.shape_cast %61 : vector<8xf32> to vector<8x1xf32>
    %cst_9 = arith.constant 3.125000e-02 : f32
    %63 = vector.broadcast %cst_9 : f32 to vector<8x1xf32>
    %64 = arith.mulf %62, %63 : vector<8x1xf32>
    %cst_10 = arith.constant 9.99999974E-6 : f32
    %65 = vector.broadcast %cst_10 : f32 to vector<8x1xf32>
    %66 = arith.addf %64, %65 : vector<8x1xf32>
    %67 = math.rsqrt %66 : vector<8x1xf32>
    %68 = vector.broadcast %67 : vector<8x1xf32> to vector<8x32xf32>
    %69 = arith.mulf %59, %68 : vector<8x32xf32>
    %c0_11 = arith.constant 0 : index
    %c0_12 = arith.constant 0 : index
    %70 = vector.load %arg4[%c0_11, %c0_12] : memref<2x32xf32, #tpu.memory_space<vmem>>, vector<1x32xf32>
    %c1 = arith.constant 1 : index
    %c0_13 = arith.constant 0 : index
    %71 = vector.load %arg4[%c1, %c0_13] : memref<2x32xf32, #tpu.memory_space<vmem>>, vector<1x32xf32>
    %72 = vector.broadcast %70 : vector<1x32xf32> to vector<8x32xf32>
    %73 = arith.mulf %69, %72 : vector<8x32xf32>
    %74 = vector.broadcast %71 : vector<1x32xf32> to vector<8x32xf32>
    %75 = arith.addf %73, %74 : vector<8x32xf32>
    %c0_14 = arith.constant 0 : index
    %c0_15 = arith.constant 0 : index
    %76 = vector.load %arg5[%c0_14, %c0_15] : memref<8x32xf32, #tpu.memory_space<vmem>>, vector<8x32xf32>
    tpu.vector_store %arg5[%c0_14, %c0_15], %75 {strides = array<i32>} : memref<8x32xf32, #tpu.memory_space<vmem>>, vector<8x32xf32>,
    return
  }
  func.func @transform_0(%arg0: i32) -> (i32, i32, i32) {
    %c0_i32 = arith.constant 0 : i32
    %c0_i32_0 = arith.constant 0 : i32
    %c0_i32_1 = arith.constant 0 : i32
    return %arg0, %c0_i32, %c0_i32_0 : i32, i32, i32
  }
  func.func @transform_1(%arg0: i32) -> (i32, i32) {
    %c0_i32 = arith.constant 0 : i32
    %c0_i32_0 = arith.constant 0 : i32
    return %arg0, %c0_i32 : i32, i32
  }
  func.func @transform_2(%arg0: i32) -> (i32, i32) {
    %c0_i32 = arith.constant 0 : i32
    %c0_i32_0 = arith.constant 0 : i32
    %c0_i32_1 = arith.constant 0 : i32
    return %c0_i32, %c0_i32_0 : i32, i32
  }
  func.func @transform_3(%arg0: i32) -> (i32, i32) {
    %c0_i32 = arith.constant 0 : i32
    %c0_i32_0 = arith.constant 0 : i32
    %c0_i32_1 = arith.constant 0 : i32
    return %c0_i32, %c0_i32_0 : i32, i32
  }
  func.func @transform_4(%arg0: i32) -> (i32, i32) {
    %c0_i32 = arith.constant 0 : i32
    %c0_i32_0 = arith.constant 0 : i32
    return %arg0, %c0_i32 : i32, i32
  }
}

</mosaic_0001>

<llo_original>
// kernel: tpu_custom_call.1
$region0: #{tpu_custom_call.1}
  #allocation0 [shape = 'u32[]', space=smem, size = 0x4, offset = 0x4, fixed_abs, tag = 'smem constant byte address 0x4 - core index']
  #allocation1 [shape = 'u32[144,128]{1,0:T(1,128)}', space=vmem, size = 0x12000, scoped, tag = 'internal scratch']
  %s0 = inlined_call_operand.hbm [shape: f32[2,8,8], index: 0, kind: input, shape index: {}]
  %s1 = inlined_call_operand.hbm [shape: f32[16,32], index: 1, kind: input, shape index: {}]
  %s2 = inlined_call_operand.hbm [shape: f32[32,32], index: 2, kind: input, shape index: {}]
  %s3 = inlined_call_operand.vmem [shape: f32[2,32], index: 3, kind: input, shape index: {}]
  %s4 = inlined_call_operand.hbm [shape: f32[16,32], index: 4, kind: output, shape index: {}]
  %s5 = sld [smem:[#allocation0]]
  $region61: #{tpu_custom_call.1} parent=0
    _
  %s7 = ssub.s32 1, %s5
  %s8 = scalar_select 0, %s7, %s5
  $region1: #{tpu_custom_call.1} parent=0
    #allocation2 [shape = 'u8[8192]{0}', space=vmem, size = 0x2000, scoped, tag = 'input window, operand 0']
    #allocation3 [shape = 's32[2]{0}', space=sflag, size = 0x8, scoped, tag = 'scoped memory for tpu_custom_call.1']
    #allocation4 [shape = 's32[2]{0}', space=sflag, size = 0x8, scoped, tag = 'scoped memory for tpu_custom_call.1']
    #allocation5 [shape = 'u8[8192]{0}', space=vmem, size = 0x2000, scoped, tag = 'input window, operand 1']
    #allocation6 [shape = 's32[2]{0}', space=sflag, size = 0x8, scoped, tag = 'scoped memory for tpu_custom_call.1']
    #allocation7 [shape = 'u8[16384]{0}', space=vmem, size = 0x4000, scoped, tag = 'input window, operand 2, single buffered']
    #allocation8 [shape = 'u8[8192]{0}', space=vmem, size = 0x2000, scoped, tag = 'output window, operand 0']
    %9 = vsyncpa [#allocation3], 0
    %s10 = scalar_lea.sflag [#allocation3], 1
    %11 = vsyncpa %s10, 0
    %12 = vsyncpa [#allocation6], 0
    %s13 = scalar_lea.sflag [#allocation6], 1
    %14 = vsyncpa %s13, 0
    %15 = vsyncpa [#allocation4], 0
    %s16 = scalar_lea.sflag [#allocation4], 1
    %17 = vsyncpa %s16, 0
    loop: start=0, step=1, limit=4
    $region2: #{tpu_custom_call.1} parent=1 // loop_pre_header
      _
    $region3: #{tpu_custom_call.1} parent=1 // loop_header
      %s19 = sphi 0, %s23
      %p20 = scmp.ge.s32.totalorder %s19, 4
      %s29 = sphi 0, %s31
      %s32 = sphi 0, %s29
      %s33 = sphi 0, %s32
      %s49 = sphi 0, %s33
      %s55 = sphi 0, %s57
      %s58 = sphi 0, %s55
      %s59 = sphi 0, %s58
      %s75 = sphi 0, %s59
      %s79 = sphi 0, %s79
      %s81 = sphi 0, %s79
      %s82 = sphi 0, %s81
      %s96 = sphi 0, %s82
      %s100 = sphi 0, %s100
      %s102 = sphi 0, %s100
      %s103 = sphi 0, %s102
      %s117 = sphi 0, %s103
      %s123 = sphi 0, %s125
      %s126 = sphi 0, %s123
      %s127 = sphi 0, %s126
      %s143 = sphi 0, %s127
    $region4: #{tpu_custom_call.1} parent=1 // loop_header_branch
      %22 = sbr.rel (%p20) target = $region8
    $region5: #{tpu_custom_call.1} parent=1 // loop_body
      %s24 = ssub.s32 %s19, 1
      %s25 = ssub.s32 %s19, 2
      %s26 = sadd.s32 %s19, 1
      %s27 = ssub.s32 %s19, %s26
      %p28 = scmp.eq.s32.totalorder %s27, 0
      %s30 = sadd.s32 %s29, 1
      %s31 = scalar_select %p28, %s29, %s30
      %p34 = pneg %p28
      %p35 = scmp.eq.s32.totalorder %s19, 1
      %p36 = por %p34, %p35
      %p37 = scmp.ne.s32.totalorder %s29, %s32
      %p38 = scmp.eq.s32.totalorder %s19, 0
      %p39 = por %p37, %p38
      %p40 = scmp.ne.s32.totalorder %s29, %s32
      %p41 = scmp.eq.s32.totalorder %s24, 1
      %p42 = por %p40, %p41
      %p43 = scmp.ne.s32.totalorder %s32, %s33
      %p44 = scmp.eq.s32.totalorder %s24, 0
      %p45 = por %p43, %p44
      %p46 = scmp.ne.s32.totalorder %s32, %s33
      %p47 = scmp.eq.s32.totalorder %s25, 1
      %p48 = por %p46, %p47
      %p50 = scmp.ne.s32.totalorder %s33, %s49
      %p51 = scmp.eq.s32.totalorder %s25, 0
      %p52 = por %p50, %p51
      %s53 = ssub.s32 %s19, %s26
      %p54 = scmp.eq.s32.totalorder %s53, 0
      %s56 = sadd.s32 %s55, 1
      %s57 = scalar_select %p54, %s55, %s56
      %p60 = pneg %p54
      %p61 = scmp.eq.s32.totalorder %s19, 1
      %p62 = por %p60, %p61
      %p63 = scmp.ne.s32.totalorder %s55, %s58
      %p64 = scmp.eq.s32.totalorder %s19, 0
      %p65 = por %p63, %p64
      %p66 = scmp.ne.s32.totalorder %s55, %s58
      %p67 = scmp.eq.s32.totalorder %s24, 1
      %p68 = por %p66, %p67
      %p69 = scmp.ne.s32.totalorder %s58, %s59
      %p70 = scmp.eq.s32.totalorder %s24, 0
      %p71 = por %p69, %p70
      %p72 = scmp.ne.s32.totalorder %s58, %s59
      %p73 = scmp.eq.s32.totalorder %s25, 1
      %p74 = por %p72, %p73
      %p76 = scmp.ne.s32.totalorder %s59, %s75
      %p77 = scmp.eq.s32.totalorder %s25, 0
      %p78 = por %p76, %p77
      %s80 = sadd.s32 %s79, 1
      %p83 = scmp.eq.s32.totalorder %s19, 1
      %p84 = scmp.ne.s32.totalorder %s79, %s81
      %p85 = scmp.eq.s32.totalorder %s19, 0
      %p86 = por %p84, %p85
      %p87 = scmp.ne.s32.totalorder %s79, %s81
      %p88 = scmp.eq.s32.totalorder %s24, 1
      %p89 = por %p87, %p88
      %p90 = scmp.ne.s32.totalorder %s81, %s82
      %p91 = scmp.eq.s32.totalorder %s24, 0
      %p92 = por %p90, %p91
      %p93 = scmp.ne.s32.totalorder %s81, %s82
      %p94 = scmp.eq.s32.totalorder %s25, 1
      %p95 = por %p93, %p94
      %p97 = scmp.ne.s32.totalorder %s82, %s96
      %p98 = scmp.eq.s32.totalorder %s25, 0
      %p99 = por %p97, %p98
      %s101 = sadd.s32 %s100, 1
      %p104 = scmp.eq.s32.totalorder %s19, 1
      %p105 = scmp.ne.s32.totalorder %s100, %s102
      %p106 = scmp.eq.s32.totalorder %s19, 0
      %p107 = por %p105, %p106
      %p108 = scmp.ne.s32.totalorder %s100, %s102
      %p109 = scmp.eq.s32.totalorder %s24, 1
      %p110 = por %p108, %p109
      %p111 = scmp.ne.s32.totalorder %s102, %s103
      %p112 = scmp.eq.s32.totalorder %s24, 0
      %p113 = por %p111, %p112
      %p114 = scmp.ne.s32.totalorder %s102, %s103
      %p115 = scmp.eq.s32.totalorder %s25, 1
      %p116 = por %p114, %p115
      %p118 = scmp.ne.s32.totalorder %s103, %s117
      %p119 = scmp.eq.s32.totalorder %s25, 0
      %p120 = por %p118, %p119
      %s121 = ssub.s32 %s19, %s26
      %p122 = scmp.eq.s32.totalorder %s121, 0
      %s124 = sadd.s32 %s123, 1
      %s125 = scalar_select %p122, %s123, %s124
      %p128 = pneg %p122
      %p129 = scmp.eq.s32.totalorder %s19, 1
      %p130 = por %p128, %p129
      %p131 = scmp.ne.s32.totalorder %s123, %s126
      %p132 = scmp.eq.s32.totalorder %s19, 0
      %p133 = por %p131, %p132
      %p134 = scmp.ne.s32.totalorder %s123, %s126
      %p135 = scmp.eq.s32.totalorder %s24, 1
      %p136 = por %p134, %p135
      %p137 = scmp.ne.s32.totalorder %s126, %s127
      %p138 = scmp.eq.s32.totalorder %s24, 0
      %p139 = por %p137, %p138
      %p140 = scmp.ne.s32.totalorder %s126, %s127
      %p141 = scmp.eq.s32.totalorder %s25, 1
      %p142 = por %p140, %p141
      %p144 = scmp.ne.s32.totalorder %s127, %s143
      %p145 = scmp.eq.s32.totalorder %s25, 0
      %p146 = por %p144, %p145
      %p147 = scmp.le.s32.totalorder 1, %s19
      %p148 = scmp.lt.s32.totalorder %s19, 3
      %p149 = pnand %p147, %p148
      %p150 = pneg %p149
      // Predicated region
      $region9: #{tpu_custom_call.1} parent=5 // pred_check
        _
      $region10: #{tpu_custom_call.1} parent=5 // pred_check_branch
        %152 = sbr.rel (%p149) target = $region12
      $region11: #{tpu_custom_call.1} parent=5 // pred_region
        %s153 = ssub.s32 %s19, 1
        // Predicated region
        $region13: #{tpu_custom_call.1} parent=11 // pred_check
          %p154 = pneg %p92
        $region14: #{tpu_custom_call.1} parent=11 // pred_check_branch
          %156 = sbr.rel (%p154) target = $region16
        $region15: #{tpu_custom_call.1} parent=11 // pred_region
          %s158 = ssub.s32 512, 512
          %159 = vsyncadd [#allocation6], %s158
          %s160 = sshll.u32 [#allocation7], 4
          %s161 = int_to_ptr.vmem [resolvable:$true] %s160
          %166 = dma.hbm_to_vmem [thread:$0]  %s2, 512, %s161, [#allocation6], 128, 128, 8
        $region16: #{tpu_custom_call.1} parent=11 // pred_fallthru
          _
        // Predicated region
        $region17: #{tpu_custom_call.1} parent=11 // pred_check
          %p167 = pneg %p113
        $region18: #{tpu_custom_call.1} parent=11 // pred_check_branch
          %169 = sbr.rel (%p167) target = $region20
        $region19: #{tpu_custom_call.1} parent=11 // pred_region
          _
        $region20: #{tpu_custom_call.1} parent=11 // pred_fallthru
          _
      $region12: #{tpu_custom_call.1} parent=5 // pred_fallthru
        _
      %p170 = scmp.lt.s32.totalorder %s19, 2
      // Predicated region
      $region21: #{tpu_custom_call.1} parent=5 // pred_check
        %p171 = pneg %p170
      $region22: #{tpu_custom_call.1} parent=5 // pred_check_branch
        %173 = sbr.rel (%p171) target = $region24
      $region23: #{tpu_custom_call.1} parent=5 // pred_region
        // Predicated region
        $region25: #{tpu_custom_call.1} parent=23 // pred_check
          %p174 = pneg %p39
        $region26: #{tpu_custom_call.1} parent=23 // pred_check_branch
          %176 = sbr.rel (%p174) target = $region28
        $region27: #{tpu_custom_call.1} parent=23 // pred_region
          %s177 = sand.u32 %s29, 1
          %s178 = scalar_lea.sflag [#allocation3], %s177
          %s179 = sand.u32 %s29, 1
          %s180 = smul.addr %s179, 8
          %s181 = scalar_lea.vmem [#allocation2], %s180
          %s183 = ssub.s32 128, 128
          %184 = vsyncadd %s178, %s183
          %s185 = smul.addr %s19, 128
          %s186 = scalar_lea.hbm %s0, %s185
          %s188 = sshll.u32 %s181, 4
          %s189 = int_to_ptr.vmem [resolvable:$true] %s188
          %191 = dma.hbm_to_vmem [thread:$0]  %s186, 128, %s189, %s178
        $region28: #{tpu_custom_call.1} parent=23 // pred_fallthru
          _
        // Predicated region
        $region29: #{tpu_custom_call.1} parent=23 // pred_check
          %p192 = pneg %p65
        $region30: #{tpu_custom_call.1} parent=23 // pred_check_branch
          %194 = sbr.rel (%p192) target = $region32
        $region31: #{tpu_custom_call.1} parent=23 // pred_region
          %s195 = sand.u32 %s19, 1
          %s196 = scalar_lea.sflag [#allocation6], %s195
          %s197 = sand.u32 %s55, 1
          %s198 = smul.addr %s197, 8
          %s199 = scalar_lea.vmem [#allocation5], %s198
          %s201 = ssub.s32 128, 128
          %202 = vsyncadd %s196, %s201
          %s203 = smul.addr %s19, 128
          %s204 = scalar_lea.hbm %s1, %s203
          %s206 = sshll.u32 %s199, 4
          %s207 = int_to_ptr.vmem [resolvable:$true] %s206
          %209 = dma.hbm_to_vmem [thread:$0]  %s204, 128, %s207, %s196
        $region32: #{tpu_custom_call.1} parent=23 // pred_fallthru
          _
      $region24: #{tpu_custom_call.1} parent=5 // pred_fallthru
        _
      %p210 = scmp.le.s32.totalorder 1, %s19
      %p211 = scmp.lt.s32.totalorder %s19, 3
      %p212 = pnand %p210, %p211
      %p213 = pneg %p212
      // Predicated region
      $region33: #{tpu_custom_call.1} parent=5 // pred_check
        _
      $region34: #{tpu_custom_call.1} parent=5 // pred_check_branch
        %215 = sbr.rel (%p212) target = $region36
      $region35: #{tpu_custom_call.1} parent=5 // pred_region
        %s216 = ssub.s32 %s19, 1
        %s217 = sand.u32 %s32, 1
        %s218 = scalar_lea.sflag [#allocation3], %s217
        %s219 = sand.u32 %s32, 1
        %s220 = smul.addr %s219, 8
        %s221 = scalar_lea.vmem [#allocation2], %s220
        // Predicated region
        $region37: #{tpu_custom_call.1} parent=35 // pred_check
          %p222 = pneg %p45
        $region38: #{tpu_custom_call.1} parent=35 // pred_check_branch
          %224 = sbr.rel (%p222) target = $region40
        $region39: #{tpu_custom_call.1} parent=35 // pred_region
          %225 = dma.done %s218, 128
        $region40: #{tpu_custom_call.1} parent=35 // pred_fallthru
          _
        %s226 = sand.u32 %s24, 1
        %s227 = scalar_lea.sflag [#allocation6], %s226
        %s228 = sand.u32 %s58, 1
        %s229 = smul.addr %s228, 8
        %s230 = scalar_lea.vmem [#allocation5], %s229
        // Predicated region
        $region41: #{tpu_custom_call.1} parent=35 // pred_check
          %p231 = pneg %p71
        $region42: #{tpu_custom_call.1} parent=35 // pred_check_branch
          %233 = sbr.rel (%p231) target = $region44
        $region43: #{tpu_custom_call.1} parent=35 // pred_region
          %234 = dma.done %s227, 128
        $region44: #{tpu_custom_call.1} parent=35 // pred_fallthru
          _
        // Predicated region
        $region45: #{tpu_custom_call.1} parent=35 // pred_check
          %p235 = pneg %p92
        $region46: #{tpu_custom_call.1} parent=35 // pred_check_branch
          %237 = sbr.rel (%p235) target = $region48
        $region47: #{tpu_custom_call.1} parent=35 // pred_region
          %238 = dma.done [#allocation6], 512
        $region48: #{tpu_custom_call.1} parent=35 // pred_fallthru
          _
        %s239 = sand.u32 %s32, 1
        %s240 = scalar_lea.sflag [#allocation3], %s239
        %s241 = sand.u32 %s32, 1
        %s242 = smul.addr %s241, 8
        %s243 = scalar_lea.vmem [#allocation2], %s242
        %p244 = pneg %p45
        %p245 = pneg %p42
        %s246 = sand.u32 %s24, 1
        %s247 = scalar_lea.sflag [#allocation6], %s246
        %s248 = sand.u32 %s58, 1
        %s249 = smul.addr %s248, 8
        %s250 = scalar_lea.vmem [#allocation5], %s249
        %p251 = pneg %p71
        %p252 = pneg %p68
        %p253 = pneg %p92
        %p254 = pneg %p89
        %p255 = pneg %p113
        %p256 = pneg %p110
        %p257 = pneg %p139
        %p258 = pneg %p136
        %s259 = sand.u32 %s126, 1
        %s260 = scalar_lea.sflag [#allocation4], %s259
        %s261 = sand.u32 %s126, 1
        %s262 = smul.addr %s261, 8
        %s263 = scalar_lea.vmem [#allocation8], %s262
        %v264 = vld [vmem:[%s230] sm:$0xff]
        %v265 = vld [vmem:[#allocation7] sm:$0xff]
        %v266 = vld [vmem:[#allocation7 + $0x8] sm:$0xff]
        %v267 = vld [vmem:[#allocation7 + $0x10] sm:$0xff]
        %v268 = vld [vmem:[#allocation7 + $0x18] sm:$0xff]
        %vm269 = vcmask 261120
        %v271 = vsel %vm269, %v264, 0
        %273 = vmatprep.subr.mxu0 0.0
        %274 = vmatpush1.msra.mxu0 %v265
        %275 = vmatprep.subr.mxu0 0.0
        %276 = vmatpush1.msra.mxu0 %v266
        %277 = vmatprep.subr.mxu0 0.0
        %278 = vmatpush1.msra.mxu0 %v267
        %279 = vmatprep.subr.mxu0 0.0
        %280 = vmatpush1.msra.mxu0 %v268
        %281 = vmatprep.subr.mxu0 0.0
        %282 = vmatpush1.msra.mxu0 0.0
        %283 = vmatprep.subr.mxu0 0.0
        %284 = vmatpush1.msra.mxu0 0.0
        %285 = vmatprep.subr.mxu0 0.0
        %286 = vmatpush1.msra.mxu0 0.0
        %287 = vmatprep.subr.mxu0 0.0
        %288 = vmatpush1.msra.mxu0 0.0
        %289 = vmatprep.subr.mxu0 0.0
        %290 = vmatpush1.msra.mxu0 0.0
        %291 = vmatprep.subr.mxu0 0.0
        %292 = vmatpush1.msra.mxu0 0.0
        %293 = vmatprep.subr.mxu0 0.0
        %294 = vmatpush1.msra.mxu0 0.0
        %295 = vmatprep.subr.mxu0 0.0
        %296 = vmatpush1.msra.mxu0 0.0
        %297 = vmatprep.subr.mxu0 0.0
        %298 = vmatpush1.msra.mxu0 0.0
        %299 = vmatprep.subr.mxu0 0.0
        %300 = vmatpush1.msra.mxu0 0.0
        %301 = vmatprep.subr.mxu0 0.0
        %302 = vmatpush1.msra.mxu0 0.0
        %303 = vmatprep.subr.mxu0 0.0
        %304 = vmatpush1.msra.mxu0 0.0
        %305 = vmatprep.subr.mxu0 0.0
        %306 = vmatpush1.msra.mxu0 0.0
        %307 = vmatprep.subr.mxu0 0.0
        %308 = vmatpush1.msra.mxu0 0.0
        %309 = vmatprep.subr.mxu0 0.0
        %310 = vmatpush1.msra.mxu0 0.0
        %311 = vmatprep.subr.mxu0 0.0
        %312 = vmatpush1.msra.mxu0 0.0
        %313 = vmatprep.subr.mxu0 0.0
        %314 = vmatpush1.msra.mxu0 0.0
        %315 = vmatprep.subr.mxu0 0.0
        %316 = vmatpush1.msra.mxu0 0.0
        %317 = vmatprep.subr.mxu0 0.0
        %318 = vmatpush1.msra.mxu0 0.0
        %319 = vmatprep.subr.mxu0 0.0
        %320 = vmatpush1.msra.mxu0 0.0
        %321 = vmatprep.subr.mxu0 0.0
        %322 = vmatpush1.msra.mxu0 0.0
        %323 = vmatprep.subr.mxu0 0.0
        %324 = vmatpush1.msra.mxu0 0.0
        %325 = vmatprep.subr.mxu0 0.0
        %326 = vmatpush1.msra.mxu0 0.0
        %327 = vmatprep.subr.mxu0 0.0
        %328 = vmatpush1.msra.mxu0 0.0
        %329 = vmatprep.subr.mxu0 0.0
        %330 = vmatpush1.msra.mxu0 0.0
        %331 = vmatprep.subr.mxu0 0.0
        %332 = vmatpush1.msra.mxu0 0.0
        %333 = vmatprep.subr.mxu0 0.0
        %334 = vmatpush1.msra.mxu0 0.0
        %335 = vmatprep.subr.mxu0 0.0
        %336 = vmatpush1.msra.mxu0 0.0
        %337 = vmatprep.mubr.f32.mxu0 0.0
        %338 = vmatmul.mubr.f32.gmra.mrb[0].mxu0 %v271
        %v339 = vpop.f32.mrb[0].mxu0
        %v340 = vadd.f32 0.0, %v339
        %v341 = vpop.f32.mrb[0].mxu0
        %342 = vdwg.mxu0
        %v343 = vld [vmem:[%s221] sm:$0xff]
        %345 = vset.pattern.permute.xlu0 0
        %346 = vperm.xlu0 %345, %v343
        %v347 = vpop.permute.xlu0 %346
        %v349 = vlaneseq
        %v350 = vshrl.u32 %v349, 7
        %v351 = vsub.s32 0, %v350
        %v352 = vrot.slane %v340, %v351
        %v353 = vmul.f32 %v347, %v352
        %354 = vset.pattern.permute.xlu0 1
        %355 = vperm.xlu0 %354, %v343
        %v356 = vpop.permute.xlu0 %355
        %v358 = vlaneseq
        %v359 = vshrl.u32 %v358, 7
        %v360 = vsub.s32 1, %v359
        %v361 = vrot.slane %v340, %v360
        %v362 = vmul.f32 %v356, %v361
        %v363 = vadd.f32 %v353, %v362
        %364 = vset.pattern.permute.xlu0 2
        %365 = vperm.xlu0 %364, %v343
        %v366 = vpop.permute.xlu0 %365
        %v368 = vlaneseq
        %v369 = vshrl.u32 %v368, 7
        %v370 = vsub.s32 2, %v369
        %v371 = vrot.slane %v340, %v370
        %v372 = vmul.f32 %v366, %v371
        %v373 = vadd.f32 %v363, %v372
        %374 = vset.pattern.permute.xlu0 3
        %375 = vperm.xlu0 %374, %v343
        %v376 = vpop.permute.xlu0 %375
        %v378 = vlaneseq
        %v379 = vshrl.u32 %v378, 7
        %v380 = vsub.s32 3, %v379
        %v381 = vrot.slane %v340, %v380
        %v382 = vmul.f32 %v376, %v381
        %v383 = vadd.f32 %v373, %v382
        %384 = vset.pattern.permute.xlu0 4
        %385 = vperm.xlu0 %384, %v343
        %v386 = vpop.permute.xlu0 %385
        %v388 = vlaneseq
        %v389 = vshrl.u32 %v388, 7
        %v390 = vsub.s32 4, %v389
        %v391 = vrot.slane %v340, %v390
        %v392 = vmul.f32 %v386, %v391
        %v393 = vadd.f32 %v383, %v392
        %394 = vset.pattern.permute.xlu0 5
        %395 = vperm.xlu0 %394, %v343
        %v396 = vpop.permute.xlu0 %395
        %v398 = vlaneseq
        %v399 = vshrl.u32 %v398, 7
        %v400 = vsub.s32 5, %v399
        %v401 = vrot.slane %v340, %v400
        %v402 = vmul.f32 %v396, %v401
        %v403 = vadd.f32 %v393, %v402
        %404 = vset.pattern.permute.xlu0 6
        %405 = vperm.xlu0 %404, %v343
        %v406 = vpop.permute.xlu0 %405
        %v408 = vlaneseq
        %v409 = vshrl.u32 %v408, 7
        %v410 = vsub.s32 6, %v409
        %v411 = vrot.slane %v340, %v410
        %v412 = vmul.f32 %v406, %v411
        %v413 = vadd.f32 %v403, %v412
        %414 = vset.pattern.permute.xlu0 7
        %415 = vperm.xlu0 %414, %v343
        %v416 = vpop.permute.xlu0 %415
        %v418 = vlaneseq
        %v419 = vshrl.u32 %v418, 7
        %v420 = vsub.s32 7, %v419
        %v421 = vrot.slane %v340, %v420
        %v422 = vmul.f32 %v416, %v421
        %v423 = vadd.f32 %v413, %v422
        %v424 = vadd.f32 %v264, %v423
        %v425 = vsel %vm269, %v424, 0.0
        %426 = vadd.xlane.f32.xlu0 %v425
        %v427 = vpop.xlane.xlu0 %426
        %v428 = vmul.f32 %v427, 0.03125
        %v429 = vsub.f32 %v424, %v428
        %v430 = vmul.f32 %v429, %v429
        %v431 = vsel %vm269, %v430, 0.0
        %432 = vadd.xlane.f32.xlu0 %v431
        %v433 = vpop.xlane.xlu0 %432
        %v434 = vmul.f32 %v433, 0.03125
        %v435 = vadd.f32 %v434, 1e-05
        %v436 = vrsqrt.pop %v435
        %v437 = vmul.f32 %v429, %v436
        %v438 = vld [vmem:[%s3] sm:$0x1]
        %v439 = vld [vmem:[%s3 + $0x1] sm:$0x1]
        %v440 = vlaneseq
        %v441 = vshrl.u32 %v440, 7
        %v442 = vsub.s32 0, %v441
        %v443 = vrot.slane %v438, %v442
        %v444 = vmul.f32 %v437, %v443
        %v445 = vlaneseq
        %v446 = vshrl.u32 %v445, 7
        %v447 = vsub.s32 0, %v446
        %v448 = vrot.slane %v439, %v447
        %v449 = vadd.f32 %v444, %v448
        %450 = vst.msk [vmem:[%s263] sm:$0xff] %vm269, %v449
        %s451 = sand.u32 %s126, 1
        %s452 = scalar_lea.sflag [#allocation4], %s451
        %s453 = sand.u32 %s126, 1
        %s454 = smul.addr %s453, 8
        %s455 = scalar_lea.vmem [#allocation8], %s454
        // Predicated region
        $region49: #{tpu_custom_call.1} parent=35 // pred_check
          %p456 = pneg %p136
        $region50: #{tpu_custom_call.1} parent=35 // pred_check_branch
          %458 = sbr.rel (%p456) target = $region52
        $region51: #{tpu_custom_call.1} parent=35 // pred_region
          %s460 = ssub.s32 128, 128
          %461 = vsyncadd %s452, %s460
          %s462 = smul.addr %s24, 128
          %s463 = scalar_lea.hbm %s4, %s462
          %s465 = sshll.u32 %s455, 4
          %s466 = int_to_ptr.vmem [resolvable:$true] %s465
          %468 = dma.vmem_to_hbm [thread:$0]  %s466, 128, %s463, %s452
        $region52: #{tpu_custom_call.1} parent=35 // pred_fallthru
          _
      $region36: #{tpu_custom_call.1} parent=5 // pred_fallthru
        _
      %p469 = scmp.le.s32.totalorder 2, %s19
      // Predicated region
      $region53: #{tpu_custom_call.1} parent=5 // pred_check
        %p470 = pneg %p469
      $region54: #{tpu_custom_call.1} parent=5 // pred_check_branch
        %472 = sbr.rel (%p470) target = $region56
      $region55: #{tpu_custom_call.1} parent=5 // pred_region
        %s473 = ssub.s32 %s19, 2
        // Predicated region
        $region57: #{tpu_custom_call.1} parent=55 // pred_check
          %p474 = pneg %p142
        $region58: #{tpu_custom_call.1} parent=55 // pred_check_branch
          %476 = sbr.rel (%p474) target = $region60
        $region59: #{tpu_custom_call.1} parent=55 // pred_region
          %s477 = sand.u32 %s127, 1
          %s478 = scalar_lea.sflag [#allocation4], %s477
          %s479 = sand.u32 %s127, 1
          %s480 = smul.addr %s479, 8
          %s481 = scalar_lea.vmem [#allocation8], %s480
          %482 = dma.done %s478, 128
        $region60: #{tpu_custom_call.1} parent=55 // pred_fallthru
          _
      $region56: #{tpu_custom_call.1} parent=5 // pred_fallthru
        _
    $region6: #{tpu_custom_call.1} parent=1 // loop_footer
      %s23 = sadd.s32 1, %s19
    $region7: #{tpu_custom_call.1} parent=1 // loop_footer_branch
      %18 = sbr.rel target = $region3
    $region8: #{tpu_custom_call.1} parent=1 // loop_exit
      _
    %483 = vsyncpa [#allocation3], 1
    %s484 = scalar_lea.sflag [#allocation3], 1
    %485 = vsyncpa %s484, 1
    %486 = vsyncpa [#allocation6], 1
    %s487 = scalar_lea.sflag [#allocation6], 1
    %488 = vsyncpa %s487, 1
    %489 = vsyncpa [#allocation4], 1
    %s490 = scalar_lea.sflag [#allocation4], 1
    %491 = vsyncpa %s490, 1

</llo_original>
